<compile_context>
chip_gen: v7x
topology: tpu7x:2x2x1
jax: 0.10.0
libtpu: 0.0.40
codegen_flags: <defaults>
</compile_context>

<pallas_src>
import math

import jax
import jax.numpy as jnp
from jax import lax
from jax.experimental import pallas as pl
from jax.experimental.pallas import tpu as pltpu

NEG_SLOPE = 0.01   # nn.LeakyReLU() default negative_slope
_TM = 512          # lane tile over output positions (multiple of 128)


# ----------------------------------------------------------------------------- kernel
def _matmul_bias_lrelu_kernel(w_ref, b_ref, p_ref, o_ref):
    """o = LeakyReLU(W @ P + b): the whole layer as one MXU matmul + fused epilogue.

    w_ref: (N, Kc)   bf16  polyphase weight matrix, N = s*s*C_out, Kc = n_off^2*C_in
    b_ref: (N, 1)    f32   bias (repeated per output phase), broadcast along lanes
    p_ref: (Kc, TM)  bf16  dense im2col patches; output positions on the lane axis
    o_ref: (N, TM)   f32
    """
    acc = jnp.dot(w_ref[...], p_ref[...], preferred_element_type=jnp.float32)
    acc = acc + b_ref[...]                                      # bias folded once
    o_ref[...] = jnp.where(acc >= 0.0, acc, NEG_SLOPE * acc)    # LeakyReLU


def _matmul_bias_lrelu(w_mat, bias_col, patches):
    """pallas_call wrapper; tiles the lane-dense output-position axis when large."""
    N, Kc = w_mat.shape
    M = patches.shape[1]
    if M <= _TM:
        Mp, tm = M, M                                  # single grid step, whole batch fused
    else:
        Mp = ((M + _TM - 1) // _TM) * _TM
        tm = _TM
        patches = jnp.pad(patches, ((0, 0), (0, Mp - M)))
    out = pl.pallas_call(
        _matmul_bias_lrelu_kernel,
        out_shape=jax.ShapeDtypeStruct((N, Mp), jnp.float32),
        grid_spec=pltpu.PrefetchScalarGridSpec(
            num_scalar_prefetch=0,
            grid=(Mp // tm,),
            in_specs=[
                pl.BlockSpec((N, Kc), lambda m: (0, 0)),   # weights stay resident
                pl.BlockSpec((N, 1), lambda m: (0, 0)),    # bias stays resident
                pl.BlockSpec((Kc, tm), lambda m: (0, m)),  # patches, lane-tiled
            ],
            out_specs=pl.BlockSpec((N, tm), lambda m: (0, m)),
        ),
        compiler_params=pltpu.CompilerParams(dimension_semantics=("parallel",)),
    )(w_mat, bias_col, patches)
    return out[:, :M]


# -------------------------------------------------------------------- polyphase helpers
def _axis_taps(K, s):
    """Per-axis phase structure of ConvTranspose(stride=s, kernel=K) + narrow(K//2).

    Output row oh = s*q + p only receives kernel taps kh with (p + kh - d0) % s == 0,
    applied to input row  a = q + (p + kh - d0)//s  (everything else is a structural
    zero of the dilated slab).  Returns (taps, o_min, n_off) where taps[p] is a list
    of (kh, offset) pairs and offsets span [o_min, o_min + n_off).
    """
    d0 = K - 1 - (K // 2)
    taps, offs = [], []
    for p in range(s):
        lst = []
        for kh in range(K):
            t = p + kh - d0
            if t % s == 0:
                lst.append((kh, t // s))
                offs.append(t // s)
        taps.append(lst)
    o_min = min(offs) if offs else 0
    o_max = max(offs) if offs else 0
    return taps, o_min, o_max - o_min + 1


# ----------------------------------------------------------------------------- module
class CNNtrans2dPallas:
    """JAX/Pallas port of mytorch.model.CNNtrans2d (forward pass only)."""

    def __init__(self, ndims, f_nums, f_sizs, strides, last_fnum=1,
                 sigmoid=False, key=jax.random.PRNGKey(0)):
        self.ndims = [self._int2tuple(d) for d in ndims]
        self.f_nums = list(f_nums) + [last_fnum]
        self.f_sizs = list(f_sizs)
        self.strides = list(strides)
        self._nlay = len(f_sizs)
        self.sigmoid = sigmoid

        # Deterministic parameter init (PyTorch-style uniform bound, synthetic).
        self.weights, self.biases = [], []
        keys = jax.random.split(key, 2 * self._nlay)
        for i in range(self._nlay):
            c_in, c_out, k = self.f_nums[i], self.f_nums[i + 1], self.f_sizs[i]
            bound = 1.0 / math.sqrt(c_in * k * k)
            w = jax.random.uniform(keys[2 * i], (c_in, c_out, k, k),
                                   minval=-bound, maxval=bound, dtype=jnp.float32)
            bb = jax.random.uniform(keys[2 * i + 1], (c_out,),
                                    minval=-bound, maxval=bound, dtype=jnp.float32)
            self.weights.append(w)
            self.biases.append(bb)

        # Precompute per-layer polyphase matmul operands (weight-only reshuffle).
        self._layers = [self._build_layer(i) for i in range(self._nlay)]

    @staticmethod
    def _int2tuple(x):
        return (x, x) if isinstance(x, int) else tuple(x)

    def _build_layer(self, i):
        c_in, c_out = self.f_nums[i], self.f_nums[i + 1]
        K, s = self.f_sizs[i], self.strides[i]
        H_in, W_in = self.ndims[i]
        H_out, W_out = self.ndims[i + 1]

        taps, o_min, n_off = _axis_taps(K, s)
        Hq, Wq = -(-H_out // s), -(-W_out // s)          # ceil(H_out/s), ceil(W_out/s)
        lt = max(0, -o_min)
        rb_h = max(0, (Hq - 1) + (o_min + n_off - 1) - (H_in - 1))
        rb_w = max(0, (Wq - 1) + (o_min + n_off - 1) - (W_in - 1))

        # Polyphase weight matrix: W_mat[(ph,pw,co), (jh,jw,ci)] holds the flipped
        # ConvTranspose tap that output phase (ph,pw) applies to input offset (jh,jw).
        # All other entries are exactly zero -> no structural-zero MACs at run time.
        w_t = self.weights[i]                                   # (C_in, C_out, K, K)
        w_flip = jnp.flip(w_t, axis=(2, 3))                     # Wf[ci,co,kh,kw]
        w_mat = jnp.zeros((s, s, c_out, n_off, n_off, c_in), jnp.float32)
        for ph in range(s):
            for (kh, oh_off) in taps[ph]:
                for pw in range(s):
                    for (kw, ow_off) in taps[pw]:
                        blk = jnp.transpose(w_flip[:, :, kh, kw], (1, 0))  # (C_out, C_in)
                        w_mat = w_mat.at[ph, pw, :,
                                         oh_off - o_min, ow_off - o_min, :].set(blk)
        w_mat = w_mat.reshape(s * s * c_out, n_off * n_off * c_in).astype(jnp.bfloat16)
        bias_col = jnp.tile(self.biases[i], s * s).reshape(s * s * c_out, 1)

        return dict(c_in=c_in, c_out=c_out, s=s, n_off=n_off, o_min=o_min,
                    Hq=Hq, Wq=Wq, lt=lt, rb_h=rb_h, rb_w=rb_w,
                    H_out=H_out, W_out=W_out,
                    w_mat=w_mat, bias_col=bias_col.astype(jnp.float32))

    @staticmethod
    def _layer_forward(x_nhwc, lp):
        """One layer: dense polyphase im2col (glue) -> fused matmul kernel -> pixel shuffle."""
        B = x_nhwc.shape[0]
        c_in, c_out, s = lp["c_in"], lp["c_out"], lp["s"]
        n_off, o_min, lt = lp["n_off"], lp["o_min"], lp["lt"]
        Hq, Wq = lp["Hq"], lp["Wq"]

        # ---- JAX glue (pure data movement): dense patches of the *undilated* input ----
        x_pad = jnp.pad(x_nhwc, ((0, 0), (lt, lp["rb_h"]), (lt, lp["rb_w"]), (0, 0)))
        cols = []
        for jh in range(n_off):
            h0 = lt + o_min + jh
            for jw in range(n_off):
                w0 = lt + o_min + jw
                cols.append(x_pad[:, h0:h0 + Hq, w0:w0 + Wq, :])     # (B, Hq, Wq, C_in)
        P = jnp.stack(cols, axis=0)                                  # (n_off^2, B, Hq, Wq, C)
        P = jnp.transpose(P, (0, 4, 1, 2, 3)).reshape(n_off * n_off * c_in, B * Hq * Wq)

        # ---- Pallas: the whole layer (all taps, all batch) as ONE matmul ----
        y = _matmul_bias_lrelu(lp["w_mat"], lp["bias_col"], P.astype(jnp.bfloat16))

        # ---- JAX glue: pixel-shuffle the s*s output phases back onto the spatial grid ----
        y = y.reshape(s, s, c_out, B, Hq, Wq)
        y = jnp.transpose(y, (3, 4, 0, 5, 1, 2)).reshape(B, Hq * s, Wq * s, c_out)
        return y[:, :lp["H_out"], :lp["W_out"], :]

    def __call__(self, x, view=True):
        if view:
            x = x.reshape(x.shape[0], self.f_nums[0],
                          self.ndims[0][0], self.ndims[0][1])   # NCHW, like torch .view
        x = jnp.transpose(x, (0, 2, 3, 1))                       # NCHW -> NHWC for kernels
        for lp in self._layers:
            x = self._layer_forward(x, lp)
        x = jnp.transpose(x, (0, 3, 1, 2))                       # NHWC -> NCHW (torch convention)
        if self.sigmoid:
            x = jax.nn.sigmoid(x)                                # elementwise glue (off by default)
        return x


# --------------------------------------------------------------------------- reference
def _reference_forward(model, x, view=True):
    """Pure-JAX (XLA conv, f32 HIGHEST) reference reproducing CNNtrans2d.forward exactly."""
    if view:
        x = x.reshape(x.shape[0], model.f_nums[0],
                      model.ndims[0][0], model.ndims[0][1])
    for i in range(model._nlay):
        w_t, b = model.weights[i], model.biases[i]
        K, s = model.f_sizs[i], model.strides[i]
        H_out, W_out = model.ndims[i + 1]
        w_conv = jnp.transpose(w_t[:, :, ::-1, ::-1], (1, 0, 2, 3))  # OIHW
        y = lax.conv_general_dilated(
            x, w_conv, window_strides=(1, 1),
            padding=((K - 1, K - 1), (K - 1, K - 1)),
            lhs_dilation=(s, s),
            dimension_numbers=("NCHW", "OIHW", "NCHW"),
            precision=lax.Precision.HIGHEST)
        y = y + b[None, :, None, None]
        off = K // 2
        y = y[:, :, off:off + H_out, off:off + W_out]
        x = jnp.where(y >= 0, y, NEG_SLOPE * y)
    if model.sigmoid:
        x = jax.nn.sigmoid(x)
    return x


if __name__ == "__main__":
    key = jax.random.PRNGKey(0)

    # Small decoder config: (B, 8, 4, 4) -> (B, 4, 8, 8) -> (B, 1, 16, 16)
    ndims = [(4, 4), (8, 8), (16, 16)]
    f_nums = [8, 4]          # + last_fnum=1 -> channels [8, 4, 1]
    f_sizs = [4, 4]
    strides = [2, 2]
    B = 2

    model = CNNtrans2dPallas(ndims, f_nums, f_sizs, strides, last_fnum=1,
                             sigmoid=False, key=key)

    x = jax.random.normal(jax.random.fold_in(key, 1),
                          (B, f_nums[0] * ndims[0][0] * ndims[0][1]),
                          dtype=jnp.float32)  # flattened input, view=True path

    out = jax.block_until_ready(model(x, view=True))
    ref = jax.block_until_ready(_reference_forward(model, x, view=True))

    assert out.shape == (B, 1, 16, 16), out.shape
    # Kernel uses bf16 matmul operands with f32 accumulation (review: drop
    # Precision.HIGHEST); compare against the f32 HIGHEST reference with a
    # correspondingly loosened tolerance.
    max_err = float(jnp.max(jnp.abs(out - ref)))
    assert jnp.allclose(out, ref, atol=2e-2, rtol=2e-2), max_err
    print("KERNEL_OK")
</pallas_src>

<mosaic_0001>
module attributes {stable_mosaic.version = 11 : i64} {
  func.func @_matmul_bias_lrelu_kernel(%arg0: i32, %arg1: memref<16x32xbf16, #tpu.memory_space<vmem>>, %arg2: memref<16x1xf32, #tpu.memory_space<vmem>>, %arg3: memref<32x32xbf16, #tpu.memory_space<vmem>>, %arg4: memref<16x32xf32, #tpu.memory_space<vmem>>) attributes {dimension_semantics = [#tpu.dimension_semantics<parallel>], iteration_bounds = array<i64: 1>, scalar_prefetch = 0 : i64, scratch_operands = 0 : i64, tpu.core_type = #tpu.core_type<tc>, window_params = [{pipeline_mode = #tpu.pipeline_mode<synchronous>, transform_indices = @transform_0, window_bounds = array<i64: 16, 32>}, {pipeline_mode = #tpu.pipeline_mode<synchronous>, transform_indices = @transform_1, window_bounds = array<i64: 16, 1>}, {transform_indices = @transform_2, window_bounds = array<i64: 32, 32>}, {transform_indices = @transform_3, window_bounds = array<i64: 16, 32>}]} {
    %c0 = arith.constant 0 : index
    %c0_0 = arith.constant 0 : index
    %0 = vector.load %arg1[%c0, %c0_0] : memref<16x32xbf16, #tpu.memory_space<vmem>>, vector<16x32xbf16>
    %c0_1 = arith.constant 0 : index
    %c0_2 = arith.constant 0 : index
    %1 = vector.load %arg3[%c0_1, %c0_2] : memref<32x32xbf16, #tpu.memory_space<vmem>>, vector<32x32xbf16>
    %cst = arith.constant dense<0.000000e+00> : vector<16x32xf32>
    %2 = tpu.matmul %0, %1, %cst {dimension_numbers = #tpu.dot_dimension_numbers<[1], [0], [0], [1], [0, 0, 1, 1], [], []>} : vector<16x32xbf16>, vector<32x32xbf16>, vector<16x32xf32> -> vector<16x32xf32>
    %c0_3 = arith.constant 0 : index
    %c0_4 = arith.constant 0 : index
    %3 = vector.load %arg2[%c0_3, %c0_4] : memref<16x1xf32, #tpu.memory_space<vmem>>, vector<16x1xf32>
    %4 = vector.broadcast %3 : vector<16x1xf32> to vector<16x32xf32>
    %5 = arith.addf %2, %4 : vector<16x32xf32>
    %cst_5 = arith.constant 0.000000e+00 : f32
    %6 = vector.broadcast %cst_5 : f32 to vector<16x32xf32>
    %7 = arith.cmpf oge, %5, %6 : vector<16x32xf32>
    %cst_6 = arith.constant 0.00999999977 : f32
    %8 = vector.broadcast %cst_6 : f32 to vector<16x32xf32>
    %9 = arith.mulf %8, %5 : vector<16x32xf32>
    %10 = arith.select %7, %5, %9 : vector<16x32xi1>, vector<16x32xf32>
    %c0_7 = arith.constant 0 : index
    %c0_8 = arith.constant 0 : index
    %11 = vector.load %arg4[%c0_7, %c0_8] : memref<16x32xf32, #tpu.memory_space<vmem>>, vector<16x32xf32>
    tpu.vector_store %arg4[%c0_7, %c0_8], %10 {strides = array<i32>} : memref<16x32xf32, #tpu.memory_space<vmem>>, vector<16x32xf32>,
    return
  }
  func.func @transform_0(%arg0: i32) -> (i32, i32) {
    %c0_i32 = arith.constant 0 : i32
    %c0_i32_0 = arith.constant 0 : i32
    %c0_i32_1 = arith.constant 0 : i32
    return %c0_i32, %c0_i32_0 : i32, i32
  }
  func.func @transform_1(%arg0: i32) -> (i32, i32) {
    %c0_i32 = arith.constant 0 : i32
    %c0_i32_0 = arith.constant 0 : i32
    %c0_i32_1 = arith.constant 0 : i32
    return %c0_i32, %c0_i32_0 : i32, i32
  }
  func.func @transform_2(%arg0: i32) -> (i32, i32) {
    %c0_i32 = arith.constant 0 : i32
    %c0_i32_0 = arith.constant 0 : i32
    return %c0_i32, %arg0 : i32, i32
  }
  func.func @transform_3(%arg0: i32) -> (i32, i32) {
    %c0_i32 = arith.constant 0 : i32
    %c0_i32_0 = arith.constant 0 : i32
    return %c0_i32, %arg0 : i32, i32
  }
}

</mosaic_0001>

<llo_original>
// kernel: tpu_custom_call.1
$region0: #{tpu_custom_call.1}
  #allocation0 [shape = 'u32[]', space=smem, size = 0x4, offset = 0x4, fixed_abs, tag = 'smem constant byte address 0x4 - core index']
  #allocation1 [shape = 'u32[144,128]{1,0:T(1,128)}', space=vmem, size = 0x12000, scoped, tag = 'internal scratch']
  %s0 = inlined_call_operand.vmem [shape: bf16[16,32], index: 0, kind: input, shape index: {}]
  %s1 = inlined_call_operand.vmem [shape: f32[16,1], index: 1, kind: input, shape index: {}]
  %s2 = inlined_call_operand.vmem [shape: bf16[32,32], index: 2, kind: input, shape index: {}]
  %s3 = inlined_call_operand.hbm [shape: f32[16,32], index: 3, kind: output, shape index: {}]
  %s4 = sld [smem:[#allocation0]]
  $region22: #{tpu_custom_call.1} parent=0
    _
  %s6 = ssub.s32 1, %s4
  %s7 = scalar_select 0, %s6, %s4
  $region1: #{tpu_custom_call.1} parent=0
    #allocation2 [shape = 'u8[8192]{0}', space=vmem, size = 0x2000, scoped, tag = 'output window, operand 0, single buffered']
    #allocation3 [shape = 's32[1]{0}', space=sflag, size = 0x4, scoped, tag = 'scoped memory for tpu_custom_call.1']
    %8 = vsyncpa [#allocation3], 0
    // Predicated region
    $region2: #{tpu_custom_call.1} parent=1 // pred_check
      _
    $region3: #{tpu_custom_call.1} parent=1 // pred_check_branch
      %10 = sbr.rel (0) target = $region5
    $region4: #{tpu_custom_call.1} parent=1 // pred_region
      _
    $region5: #{tpu_custom_call.1} parent=1 // pred_fallthru
      _
    // Predicated region
    $region6: #{tpu_custom_call.1} parent=1 // pred_check
      _
    $region7: #{tpu_custom_call.1} parent=1 // pred_check_branch
      %12 = sbr.rel (0) target = $region9
    $region8: #{tpu_custom_call.1} parent=1 // pred_region
      _
    $region9: #{tpu_custom_call.1} parent=1 // pred_fallthru
      _
    // Predicated region
    $region10: #{tpu_custom_call.1} parent=1 // pred_check
      _
    $region11: #{tpu_custom_call.1} parent=1 // pred_check_branch
      %14 = sbr.rel (0) target = $region13
    $region12: #{tpu_custom_call.1} parent=1 // pred_region
      _
    $region13: #{tpu_custom_call.1} parent=1 // pred_fallthru
      _
    %v16 = vld [vmem:[%s0] sm:$0xf]
    %v17 = vld [vmem:[%s0 + $0x4] sm:$0xf]
    %v18 = vld [vmem:[%s2] sm:$0xf]
    %v19 = vld [vmem:[%s2 + $0x4] sm:$0xf]
    %v20 = vld [vmem:[%s2 + $0x8] sm:$0xf]
    %v21 = vld [vmem:[%s2 + $0xc] sm:$0xf]
    %v22 = vld [vmem:[%s1] sm:$0xff]
    %v23 = vld [vmem:[%s1 + $0x8] sm:$0xff]
    %25 = vset.pattern.permute.xlu0 0
    %26 = vperm.xlu0 %25, %v22
    %v27 = vpop.permute.xlu0 %26
    %30 = vset.pattern.permute.xlu0 0
    %31 = vperm.xlu0 %30, %v23
    %v32 = vpop.permute.xlu0 %31
    %v36 = vunpack.c.l.b16 %v16
    %v37 = vunpack.c.l.b16 %v17
    %v38 = vpack.c.b16 %v37, %v36
    %v43 = vunpack.c.l.b16 %v18
    %v44 = vunpack.c.l.b16 %v19
    %v45 = vunpack.c.l.b16 %v20
    %v46 = vunpack.c.l.b16 %v21
    %v47 = vpack.c.b16 %v44, %v43
    %v48 = vpack.c.b16 %v46, %v45
    %vm51 = vcmask 261120
    %v53 = vsel %vm51, %v38, 0
    %55 = vmatprep.subr.bf16.mxu0 0
    %56 = vmatpush1.bf16.msra.mxu0 %v47
    %57 = vmatprep.subr.bf16.mxu0 0
    %58 = vmatpush1.bf16.msra.mxu0 %v48
    %59 = vmatprep.subr.bf16.mxu0 0
    %60 = vmatpush1.bf16.msra.mxu0 0
    %61 = vmatprep.subr.bf16.mxu0 0
    %62 = vmatpush1.bf16.msra.mxu0 0
    %63 = vmatprep.subr.bf16.mxu0 0
    %64 = vmatpush1.bf16.msra.mxu0 0
    %65 = vmatprep.subr.bf16.mxu0 0
    %66 = vmatpush1.bf16.msra.mxu0 0
    %67 = vmatprep.subr.bf16.mxu0 0
    %68 = vmatpush1.bf16.msra.mxu0 0
    %69 = vmatprep.subr.bf16.mxu0 0
    %70 = vmatpush1.bf16.msra.mxu0 0
    %71 = vmatprep.subr.bf16.mxu0 0
    %72 = vmatpush1.bf16.msra.mxu0 0
    %73 = vmatprep.subr.bf16.mxu0 0
    %74 = vmatpush1.bf16.msra.mxu0 0
    %75 = vmatprep.subr.bf16.mxu0 0
    %76 = vmatpush1.bf16.msra.mxu0 0
    %77 = vmatprep.subr.bf16.mxu0 0
    %78 = vmatpush1.bf16.msra.mxu0 0
    %79 = vmatprep.subr.bf16.mxu0 0
    %80 = vmatpush1.bf16.msra.mxu0 0
    %81 = vmatprep.subr.bf16.mxu0 0
    %82 = vmatpush1.bf16.msra.mxu0 0
    %83 = vmatprep.subr.bf16.mxu0 0
    %84 = vmatpush1.bf16.msra.mxu0 0
    %85 = vmatprep.subr.bf16.mxu0 0
    %86 = vmatpush1.bf16.msra.mxu0 0
    %87 = vmatprep.mubr.bf16.mxu0 0
    %88 = vmatmul.mubr.bf16.gmra.mrb[0].mxu0 %v53
    %v89 = vpop.f32.mrb[0].mxu0
    %v90 = vadd.f32 %v27, %v89
    %v91 = vpop.f32.mrb[0].mxu0
    %v92 = vpop.f32.mrb[0].mxu0
    %v93 = vadd.f32 %v32, %v92
    %v94 = vpop.f32.mrb[0].mxu0
    %95 = vdwg.mxu0
    %vm96 = vcmp.ge.f32.partialorder %v90, 0.0
    %vm97 = vcmp.ge.f32.partialorder %v93, 0.0
    %v98 = vmul.f32 %v90, 0.01
    %v99 = vmul.f32 %v93, 0.01
    %v100 = vsel %vm96, %v90, %v98
    %v101 = vsel %vm97, %v93, %v99
    %102 = vst.msk [vmem:[#allocation2] sm:$0xff] %vm51, %v100
    %103 = vst.msk [vmem:[#allocation2 + $0x8] sm:$0xff] %vm51, %v101
    // Predicated region
    $region14: #{tpu_custom_call.1} parent=1 // pred_check
      _
    $region15: #{tpu_custom_call.1} parent=1 // pred_check_branch
      %105 = sbr.rel (0) target = $region17
    $region16: #{tpu_custom_call.1} parent=1 // pred_region
      %s107 = ssub.s32 256, 256
      %108 = vsyncadd [#allocation3], %s107
      %s109 = sshll.u32 [#allocation2], 4
      %s110 = int_to_ptr.vmem [resolvable:$true] %s109
      %115 = dma.vmem_to_hbm [thread:$0]  %s110, 256, %s3, [#allocation3], 128, 128, 8
    $region17: #{tpu_custom_call.1} parent=1 // pred_fallthru
      _
    // Predicated region
    $region18: #{tpu_custom_call.1} parent=1 // pred_check
      _
    $region19: #{tpu_custom_call.1} parent=1 // pred_check_branch
      %117 = sbr.rel (0) target = $region21
    $region20: #{tpu_custom_call.1} parent=1 // pred_region
      %118 = dma.done [#allocation3], 256
    $region21: #{tpu_custom_call.1} parent=1 // pred_fallthru
      _
    %119 = vsyncpa [#allocation3], 1

</llo_original>
